<compile_context>
chip_gen: v7x
topology: tpu7x:2x2x1
jax: 0.10.0
libtpu: 0.0.40
codegen_flags: <defaults>
</compile_context>

<pallas_src>
import functools

import jax
import jax.numpy as jnp
from jax.experimental import pallas as pl
from jax.experimental.pallas import tpu as pltpu

_LANE = 128


def _round_up(n: int, m: int = _LANE) -> int:
    return ((n + m - 1) // m) * m


def _pad2d(a, rows: int, cols: int, dtype=None):
    """Zero-pad a 2-D array up to (rows, cols), optionally casting first."""
    if dtype is not None:
        a = a.astype(dtype)
    return jnp.pad(a, ((0, rows - a.shape[0]), (0, cols - a.shape[1])))


def make_mlp_kernel(num_hidden: int, odim: int, pad_odim: int, eps: float = 1e-5):
    """Fused MLP kernel: `num_hidden` (Linear+BN+ReLU) blocks + Linear+Softmax.

    All refs are whole (padded, lane-dense) arrays resident in VMEM.
    Ref layout: x, [w_i(bf16), gamma_i, beta_i] * num_hidden, w_out(bf16),
    b_out, out. `odim` is the unpadded class count (softmax mask).
    """

    def kernel(*refs):
        x_ref = refs[0]
        idx = 1
        h = x_ref[...]  # f32 activations

        for _ in range(num_hidden):
            w_ref, g_ref, be_ref = refs[idx:idx + 3]
            idx += 3
            # Linear WITHOUT bias: a per-feature constant bias is cancelled
            # exactly by the BatchNorm mean subtraction below.
            h = jnp.dot(h.astype(jnp.bfloat16), w_ref[...],
                        preferred_element_type=jnp.float32)
            # BatchNorm1d (training-mode biased batch stats) folded into a
            # single scale/shift FMA, fused with ReLU.
            mean = jnp.mean(h, axis=0, keepdims=True)
            var = jnp.maximum(
                jnp.mean(h * h, axis=0, keepdims=True) - mean * mean, 0.0)
            scale = g_ref[...] * jax.lax.rsqrt(var + eps)   # (1, F) row
            shift = be_ref[...] - mean * scale              # (1, F) row
            h = jnp.maximum(h * scale + shift, 0.0)
            # Padded feature columns: w cols = 0, gamma = beta = 0 -> stay 0.

        w_out_ref, b_out_ref, out_ref = refs[idx], refs[idx + 1], refs[idx + 2]
        logits = jnp.dot(h.astype(jnp.bfloat16), w_out_ref[...],
                         preferred_element_type=jnp.float32) + b_out_ref[...]

        # Mask padded output columns only when padding actually exists.
        if odim != pad_odim:
            col = jax.lax.broadcasted_iota(jnp.int32, logits.shape, 1)
            logits = jnp.where(col < odim, logits, jnp.float32(-1e30))

        # Numerically stable softmax over dim=1 with an EXACT divide
        # (approx reciprocal caused the previous row-sum assertion failure).
        m = jnp.max(logits, axis=1, keepdims=True)
        e = jnp.exp(logits - m)
        s = jnp.sum(e, axis=1, keepdims=True)
        out_ref[...] = (e / s).astype(out_ref.dtype)

    return kernel


def init_mlp_params(key, idim, odim, layers):
    """Deterministic PyTorch-style (uniform +/- 1/sqrt(fan_in)) initialization."""
    params = {"hidden": [], "out": None}
    dims = [idim] + list(layers)
    for i in range(len(layers)):
        fan_in, fan_out = dims[i], dims[i + 1]
        key, kw, kb = jax.random.split(key, 3)
        bound = 1.0 / jnp.sqrt(jnp.float32(fan_in))
        w = jax.random.uniform(kw, (fan_in, fan_out), jnp.float32, -bound, bound)
        b = jax.random.uniform(kb, (1, fan_out), jnp.float32, -bound, bound)
        gamma = jnp.ones((1, fan_out), jnp.float32)   # BN weight init
        beta = jnp.zeros((1, fan_out), jnp.float32)   # BN bias init
        params["hidden"].append((w, b, gamma, beta))
    fan_in = dims[-1]
    key, kw, kb = jax.random.split(key, 3)
    bound = 1.0 / jnp.sqrt(jnp.float32(fan_in))
    w_out = jax.random.uniform(kw, (fan_in, odim), jnp.float32, -bound, bound)
    b_out = jax.random.uniform(kb, (1, odim), jnp.float32, -bound, bound)
    params["out"] = (w_out, b_out)
    return params


def pad_mlp_params(params, idim, odim):
    """One-time lane-dense padding + bf16 weight cast (hoisted out of forward).

    Hidden-layer biases are dropped entirely (cancelled by BN mean subtraction).
    """
    padded = {"hidden": [], "out": None}
    cur = _round_up(idim)
    for (w, _b, g, be) in params["hidden"]:
        fan_out = w.shape[1]
        pad_out = _round_up(fan_out)
        padded["hidden"].append((
            _pad2d(w, cur, pad_out, jnp.bfloat16),  # MXU operand -> bf16
            _pad2d(g, 1, pad_out),                  # BN gamma, f32
            _pad2d(be, 1, pad_out),                 # BN beta, f32
        ))
        cur = pad_out
    w_out, b_out = params["out"]
    pad_odim = _round_up(odim)
    padded["out"] = (_pad2d(w_out, cur, pad_odim, jnp.bfloat16),
                     _pad2d(b_out, 1, pad_odim))   # output bias kept, f32
    return padded


@functools.partial(jax.jit, static_argnames=("odim",))
def mlp_forward(x, padded_params, odim):
    num_hidden = len(padded_params["hidden"])
    B = x.shape[0]
    pad_in = (padded_params["hidden"][0][0].shape[0] if num_hidden
              else padded_params["out"][0].shape[0])
    pad_odim = padded_params["out"][0].shape[1]

    # Only the activation input is padded per call; parameters are pre-padded.
    inputs = [_pad2d(x, B, pad_in)]
    for tpl in padded_params["hidden"]:
        inputs.extend(tpl)
    inputs.extend(padded_params["out"])

    kernel = make_mlp_kernel(num_hidden, odim, pad_odim)

    # Explicit scoped-VMEM budget (resident footprint x2 headroom, <= 64 MiB
    # so the same setting is safe on v7x's smaller VMEM).
    resident = sum(int(a.size) * a.dtype.itemsize for a in inputs)
    resident += B * pad_odim * 4
    vmem_limit = int(min(max(4 << 20, 2 * resident), 64 << 20))

    out_padded = pl.pallas_call(
        kernel,
        out_shape=jax.ShapeDtypeStruct((B, pad_odim), jnp.float32),
        in_specs=[pl.BlockSpec(memory_space=pltpu.MemorySpace.VMEM)] * len(inputs),
        out_specs=pl.BlockSpec(memory_space=pltpu.MemorySpace.VMEM),
        compiler_params=pltpu.CompilerParams(vmem_limit_bytes=vmem_limit),
    )(*inputs)

    # Padded softmax columns are exactly 0; slice them away.
    return out_padded[:, :odim]


def mlp_reference(x, params):
    """Pure-JAX reference (bf16 matmul operands to mirror kernel precision)."""
    eps = 1e-5
    h = x
    for (w, b, g, be) in params["hidden"]:
        h = jnp.dot(h.astype(jnp.bfloat16), w.astype(jnp.bfloat16),
                    preferred_element_type=jnp.float32) + b
        mean = jnp.mean(h, axis=0, keepdims=True)
        var = jnp.mean((h - mean) ** 2, axis=0, keepdims=True)
        h = (h - mean) * jax.lax.rsqrt(var + eps) * g + be
        h = jnp.maximum(h, 0.0)
    w_out, b_out = params["out"]
    logits = jnp.dot(h.astype(jnp.bfloat16), w_out.astype(jnp.bfloat16),
                     preferred_element_type=jnp.float32) + b_out
    return jax.nn.softmax(logits, axis=1)


if __name__ == "__main__":
    # Small shapes consistent with MLP(idim, odim, layers)
    B, IDIM, ODIM = 8, 32, 16
    LAYERS = (64, 32)

    key = jax.random.PRNGKey(0)
    key, kx, kp = jax.random.split(key, 3)
    x = jax.random.normal(kx, (B, IDIM), jnp.float32)
    params = init_mlp_params(kp, IDIM, ODIM, LAYERS)
    padded_params = pad_mlp_params(params, IDIM, ODIM)   # hoisted, one-time

    out = mlp_forward(x, padded_params, ODIM)
    out = jax.block_until_ready(out)

    ref = mlp_reference(x, params)
    assert out.shape == (B, ODIM)
    # Exact divide in softmax -> rows sum to 1 within f32 rounding.
    assert jnp.allclose(jnp.sum(out, axis=1), 1.0, atol=1e-4)
    assert jnp.allclose(out, ref, atol=2e-3, rtol=2e-3)

    print("KERNEL_OK")
</pallas_src>

<mosaic_0001>
module attributes {stable_mosaic.version = 11 : i64} {
  func.func @kernel(%arg0: memref<8x128xf32, #tpu.memory_space<vmem>>, %arg1: memref<128x128xbf16, #tpu.memory_space<vmem>>, %arg2: memref<1x128xf32, #tpu.memory_space<vmem>>, %arg3: memref<1x128xf32, #tpu.memory_space<vmem>>, %arg4: memref<128x128xbf16, #tpu.memory_space<vmem>>, %arg5: memref<1x128xf32, #tpu.memory_space<vmem>>, %arg6: memref<1x128xf32, #tpu.memory_space<vmem>>, %arg7: memref<128x128xbf16, #tpu.memory_space<vmem>>, %arg8: memref<1x128xf32, #tpu.memory_space<vmem>>, %arg9: memref<8x128xf32, #tpu.memory_space<vmem>>) attributes {dimension_semantics = [], scalar_prefetch = 0 : i64, scratch_operands = 0 : i64, tpu.core_type = #tpu.core_type<tc>} {
    %c0 = arith.constant 0 : index
    %c0_0 = arith.constant 0 : index
    %0 = vector.load %arg0[%c0, %c0_0] : memref<8x128xf32, #tpu.memory_space<vmem>>, vector<8x128xf32>
    %1 = arith.truncf %0 : vector<8x128xf32> to vector<8x128xbf16>
    %c0_1 = arith.constant 0 : index
    %c0_2 = arith.constant 0 : index
    %2 = vector.load %arg1[%c0_1, %c0_2] : memref<128x128xbf16, #tpu.memory_space<vmem>>, vector<128x128xbf16>
    %cst = arith.constant dense<0.000000e+00> : vector<8x128xf32>
    %3 = tpu.matmul %1, %2, %cst {dimension_numbers = #tpu.dot_dimension_numbers<[1], [0], [0], [1], [0, 0, 1, 1], [], []>} : vector<8x128xbf16>, vector<128x128xbf16>, vector<8x128xf32> -> vector<8x128xf32>
    %cst_3 = arith.constant dense<0.000000e+00> : vector<128xf32>
    %4 = vector.multi_reduction <add>, %3, %cst_3 [0] : vector<8x128xf32> to vector<128xf32>
    %5 = vector.shape_cast %4 : vector<128xf32> to vector<1x128xf32>
    %cst_4 = arith.constant 8.000000e+00 : f32
    %6 = vector.broadcast %cst_4 : f32 to vector<1x128xf32>
    %7 = arith.divf %5, %6 : vector<1x128xf32>
    %8 = arith.mulf %3, %3 : vector<8x128xf32>
    %cst_5 = arith.constant dense<0.000000e+00> : vector<128xf32>
    %9 = vector.multi_reduction <add>, %8, %cst_5 [0] : vector<8x128xf32> to vector<128xf32>
    %10 = vector.shape_cast %9 : vector<128xf32> to vector<1x128xf32>
    %cst_6 = arith.constant 8.000000e+00 : f32
    %11 = vector.broadcast %cst_6 : f32 to vector<1x128xf32>
    %12 = arith.divf %10, %11 : vector<1x128xf32>
    %13 = arith.mulf %7, %7 : vector<1x128xf32>
    %14 = arith.subf %12, %13 : vector<1x128xf32>
    %cst_7 = arith.constant 0.000000e+00 : f32
    %15 = vector.broadcast %cst_7 : f32 to vector<1x128xf32>
    %16 = arith.maximumf %14, %15 : vector<1x128xf32>
    %c0_8 = arith.constant 0 : index
    %c0_9 = arith.constant 0 : index
    %17 = vector.load %arg2[%c0_8, %c0_9] : memref<1x128xf32, #tpu.memory_space<vmem>>, vector<1x128xf32>
    %cst_10 = arith.constant 9.99999974E-6 : f32
    %18 = vector.broadcast %cst_10 : f32 to vector<1x128xf32>
    %19 = arith.addf %16, %18 : vector<1x128xf32>
    %20 = math.rsqrt %19 : vector<1x128xf32>
    %21 = arith.mulf %17, %20 : vector<1x128xf32>
    %c0_11 = arith.constant 0 : index
    %c0_12 = arith.constant 0 : index
    %22 = vector.load %arg3[%c0_11, %c0_12] : memref<1x128xf32, #tpu.memory_space<vmem>>, vector<1x128xf32>
    %23 = arith.mulf %7, %21 : vector<1x128xf32>
    %24 = arith.subf %22, %23 : vector<1x128xf32>
    %25 = vector.broadcast %21 : vector<1x128xf32> to vector<8x128xf32>
    %26 = arith.mulf %3, %25 : vector<8x128xf32>
    %27 = vector.broadcast %24 : vector<1x128xf32> to vector<8x128xf32>
    %28 = arith.addf %26, %27 : vector<8x128xf32>
    %cst_13 = arith.constant 0.000000e+00 : f32
    %29 = vector.broadcast %cst_13 : f32 to vector<8x128xf32>
    %30 = arith.maximumf %28, %29 : vector<8x128xf32>
    %31 = arith.truncf %30 : vector<8x128xf32> to vector<8x128xbf16>
    %c0_14 = arith.constant 0 : index
    %c0_15 = arith.constant 0 : index
    %32 = vector.load %arg4[%c0_14, %c0_15] : memref<128x128xbf16, #tpu.memory_space<vmem>>, vector<128x128xbf16>
    %cst_16 = arith.constant dense<0.000000e+00> : vector<8x128xf32>
    %33 = tpu.matmul %31, %32, %cst_16 {dimension_numbers = #tpu.dot_dimension_numbers<[1], [0], [0], [1], [0, 0, 1, 1], [], []>} : vector<8x128xbf16>, vector<128x128xbf16>, vector<8x128xf32> -> vector<8x128xf32>
    %cst_17 = arith.constant dense<0.000000e+00> : vector<128xf32>
    %34 = vector.multi_reduction <add>, %33, %cst_17 [0] : vector<8x128xf32> to vector<128xf32>
    %35 = vector.shape_cast %34 : vector<128xf32> to vector<1x128xf32>
    %cst_18 = arith.constant 8.000000e+00 : f32
    %36 = vector.broadcast %cst_18 : f32 to vector<1x128xf32>
    %37 = arith.divf %35, %36 : vector<1x128xf32>
    %38 = arith.mulf %33, %33 : vector<8x128xf32>
    %cst_19 = arith.constant dense<0.000000e+00> : vector<128xf32>
    %39 = vector.multi_reduction <add>, %38, %cst_19 [0] : vector<8x128xf32> to vector<128xf32>
    %40 = vector.shape_cast %39 : vector<128xf32> to vector<1x128xf32>
    %cst_20 = arith.constant 8.000000e+00 : f32
    %41 = vector.broadcast %cst_20 : f32 to vector<1x128xf32>
    %42 = arith.divf %40, %41 : vector<1x128xf32>
    %43 = arith.mulf %37, %37 : vector<1x128xf32>
    %44 = arith.subf %42, %43 : vector<1x128xf32>
    %cst_21 = arith.constant 0.000000e+00 : f32
    %45 = vector.broadcast %cst_21 : f32 to vector<1x128xf32>
    %46 = arith.maximumf %44, %45 : vector<1x128xf32>
    %c0_22 = arith.constant 0 : index
    %c0_23 = arith.constant 0 : index
    %47 = vector.load %arg5[%c0_22, %c0_23] : memref<1x128xf32, #tpu.memory_space<vmem>>, vector<1x128xf32>
    %cst_24 = arith.constant 9.99999974E-6 : f32
    %48 = vector.broadcast %cst_24 : f32 to vector<1x128xf32>
    %49 = arith.addf %46, %48 : vector<1x128xf32>
    %50 = math.rsqrt %49 : vector<1x128xf32>
    %51 = arith.mulf %47, %50 : vector<1x128xf32>
    %c0_25 = arith.constant 0 : index
    %c0_26 = arith.constant 0 : index
    %52 = vector.load %arg6[%c0_25, %c0_26] : memref<1x128xf32, #tpu.memory_space<vmem>>, vector<1x128xf32>
    %53 = arith.mulf %37, %51 : vector<1x128xf32>
    %54 = arith.subf %52, %53 : vector<1x128xf32>
    %55 = vector.broadcast %51 : vector<1x128xf32> to vector<8x128xf32>
    %56 = arith.mulf %33, %55 : vector<8x128xf32>
    %57 = vector.broadcast %54 : vector<1x128xf32> to vector<8x128xf32>
    %58 = arith.addf %56, %57 : vector<8x128xf32>
    %cst_27 = arith.constant 0.000000e+00 : f32
    %59 = vector.broadcast %cst_27 : f32 to vector<8x128xf32>
    %60 = arith.maximumf %58, %59 : vector<8x128xf32>
    %61 = arith.truncf %60 : vector<8x128xf32> to vector<8x128xbf16>
    %c0_28 = arith.constant 0 : index
    %c0_29 = arith.constant 0 : index
    %62 = vector.load %arg7[%c0_28, %c0_29] : memref<128x128xbf16, #tpu.memory_space<vmem>>, vector<128x128xbf16>
    %cst_30 = arith.constant dense<0.000000e+00> : vector<8x128xf32>
    %63 = tpu.matmul %61, %62, %cst_30 {dimension_numbers = #tpu.dot_dimension_numbers<[1], [0], [0], [1], [0, 0, 1, 1], [], []>} : vector<8x128xbf16>, vector<128x128xbf16>, vector<8x128xf32> -> vector<8x128xf32>
    %c0_31 = arith.constant 0 : index
    %c0_32 = arith.constant 0 : index
    %64 = vector.load %arg8[%c0_31, %c0_32] : memref<1x128xf32, #tpu.memory_space<vmem>>, vector<1x128xf32>
    %65 = vector.broadcast %64 : vector<1x128xf32> to vector<8x128xf32>
    %66 = arith.addf %63, %65 : vector<8x128xf32>
    %67 = tpu.iota {dimensions = array<i32: 1>} : vector<8x128xi32>
    %c16_i32 = arith.constant 16 : i32
    %68 = vector.broadcast %c16_i32 : i32 to vector<8x128xi32>
    %69 = arith.cmpi slt, %67, %68 : vector<8x128xi32>
    %cst_33 = arith.constant -1.000000e+30 : f32
    %70 = vector.broadcast %cst_33 : f32 to vector<8x128xf32>
    %71 = arith.select %69, %66, %70 : vector<8x128xi1>, vector<8x128xf32>
    %cst_34 = arith.constant dense<0xFF800000> : vector<8xf32>
    %72 = vector.multi_reduction <maximumf>, %71, %cst_34 [1] : vector<8x128xf32> to vector<8xf32>
    %73 = vector.shape_cast %72 : vector<8xf32> to vector<8x1xf32>
    %74 = vector.broadcast %73 : vector<8x1xf32> to vector<8x128xf32>
    %75 = arith.subf %71, %74 : vector<8x128xf32>
    %76 = math.exp %75 : vector<8x128xf32>
    %cst_35 = arith.constant dense<0.000000e+00> : vector<8xf32>
    %77 = vector.multi_reduction <add>, %76, %cst_35 [1] : vector<8x128xf32> to vector<8xf32>
    %78 = vector.shape_cast %77 : vector<8xf32> to vector<8x1xf32>
    %79 = vector.broadcast %78 : vector<8x1xf32> to vector<8x128xf32>
    %80 = arith.divf %76, %79 : vector<8x128xf32>
    %c0_36 = arith.constant 0 : index
    %c0_37 = arith.constant 0 : index
    %81 = vector.load %arg9[%c0_36, %c0_37] : memref<8x128xf32, #tpu.memory_space<vmem>>, vector<8x128xf32>
    tpu.vector_store %arg9[%c0_36, %c0_37], %80 {strides = array<i32>} : memref<8x128xf32, #tpu.memory_space<vmem>>, vector<8x128xf32>,
    return
  }
}

</mosaic_0001>

<llo_original>
// kernel: mlp_forward.1
$region0: #{mlp_forward.1}
  #allocation0 [shape = 'u32[]', space=smem, size = 0x4, offset = 0x4, fixed_abs, tag = 'smem constant byte address 0x4 - core index']
  #allocation1 [shape = 'u32[144,128]{1,0:T(1,128)}', space=vmem, size = 0x12000, scoped, tag = 'internal scratch']
  %s0 = inlined_call_operand.vmem [shape: f32[8,128], index: 0, kind: input, shape index: {}]
  %s1 = inlined_call_operand.hbm [shape: bf16[128,128], index: 1, kind: input, shape index: {}]
  %s2 = inlined_call_operand.vmem [shape: f32[1,128], index: 2, kind: input, shape index: {}]
  %s3 = inlined_call_operand.vmem [shape: f32[1,128], index: 3, kind: input, shape index: {}]
  %s4 = inlined_call_operand.hbm [shape: bf16[128,128], index: 4, kind: input, shape index: {}]
  %s5 = inlined_call_operand.vmem [shape: f32[1,128], index: 5, kind: input, shape index: {}]
  %s6 = inlined_call_operand.vmem [shape: f32[1,128], index: 6, kind: input, shape index: {}]
  %s7 = inlined_call_operand.hbm [shape: bf16[128,128], index: 7, kind: input, shape index: {}]
  %s8 = inlined_call_operand.vmem [shape: f32[1,128], index: 8, kind: input, shape index: {}]
  %s9 = inlined_call_operand.hbm [shape: f32[8,128], index: 9, kind: output, shape index: {}]
  %s10 = sld [smem:[#allocation0]]
  $region58: #{mlp_forward.1} parent=0
    _
  %s12 = ssub.s32 1, %s10
  %s13 = scalar_select 0, %s12, %s10
  $region1: #{mlp_forward.1} parent=0
    #allocation2 [shape = 'u8[32768]{0}', space=vmem, size = 0x8000, scoped, tag = 'input window, operand 1, single buffered']
    #allocation3 [shape = 's32[1]{0}', space=sflag, size = 0x4, scoped, tag = 'scoped memory for mlp_forward.1']
    #allocation4 [shape = 's32[1]{0}', space=sflag, size = 0x4, scoped, tag = 'scoped memory for mlp_forward.1']
    #allocation5 [shape = 'u8[32768]{0}', space=vmem, size = 0x8000, scoped, tag = 'input window, operand 4, single buffered']
    #allocation6 [shape = 's32[1]{0}', space=sflag, size = 0x4, scoped, tag = 'scoped memory for mlp_forward.1']
    #allocation7 [shape = 'u8[32768]{0}', space=vmem, size = 0x8000, scoped, tag = 'input window, operand 7, single buffered']
    #allocation8 [shape = 'u8[4096]{0}', space=vmem, size = 0x1000, scoped, tag = 'output window, operand 0, single buffered']
    %14 = vsyncpa [#allocation3], 0
    %15 = vsyncpa [#allocation6], 0
    %16 = vsyncpa [#allocation4], 0
    // Predicated region
    $region2: #{mlp_forward.1} parent=1 // pred_check
      _
    $region3: #{mlp_forward.1} parent=1 // pred_check_branch
      %18 = sbr.rel (0) target = $region5
    $region4: #{mlp_forward.1} parent=1 // pred_region
      _
    $region5: #{mlp_forward.1} parent=1 // pred_fallthru
      _
    // Predicated region
    $region6: #{mlp_forward.1} parent=1 // pred_check
      _
    $region7: #{mlp_forward.1} parent=1 // pred_check_branch
      %20 = sbr.rel (0) target = $region9
    $region8: #{mlp_forward.1} parent=1 // pred_region
      %s22 = ssub.s32 1024, 1024
      %23 = vsyncadd [#allocation3], %s22
      %s24 = sshll.u32 [#allocation2], 4
      %s25 = int_to_ptr.vmem [resolvable:$true] %s24
      %30 = dma.hbm_to_vmem [thread:$0]  %s1, 1024, %s25, [#allocation3], 64, 64, 4
    $region9: #{mlp_forward.1} parent=1 // pred_fallthru
      _
    // Predicated region
    $region10: #{mlp_forward.1} parent=1 // pred_check
      _
    $region11: #{mlp_forward.1} parent=1 // pred_check_branch
      %32 = sbr.rel (0) target = $region13
    $region12: #{mlp_forward.1} parent=1 // pred_region
      _
    $region13: #{mlp_forward.1} parent=1 // pred_fallthru
      _
    // Predicated region
    $region14: #{mlp_forward.1} parent=1 // pred_check
      _
    $region15: #{mlp_forward.1} parent=1 // pred_check_branch
      %34 = sbr.rel (0) target = $region17
    $region16: #{mlp_forward.1} parent=1 // pred_region
      _
    $region17: #{mlp_forward.1} parent=1 // pred_fallthru
      _
    // Predicated region
    $region18: #{mlp_forward.1} parent=1 // pred_check
      _
    $region19: #{mlp_forward.1} parent=1 // pred_check_branch
      %36 = sbr.rel (0) target = $region21
    $region20: #{mlp_forward.1} parent=1 // pred_region
      %s38 = ssub.s32 1024, 1024
      %39 = vsyncadd [#allocation6], %s38
      %s40 = sshll.u32 [#allocation5], 4
      %s41 = int_to_ptr.vmem [resolvable:$true] %s40
      %46 = dma.hbm_to_vmem [thread:$0]  %s4, 1024, %s41, [#allocation6], 64, 64, 4
    $region21: #{mlp_forward.1} parent=1 // pred_fallthru
      _
    // Predicated region
    $region22: #{mlp_forward.1} parent=1 // pred_check
      _
    $region23: #{mlp_forward.1} parent=1 // pred_check_branch
      %48 = sbr.rel (0) target = $region25
    $region24: #{mlp_forward.1} parent=1 // pred_region
      _
    $region25: #{mlp_forward.1} parent=1 // pred_fallthru
      _
    // Predicated region
    $region26: #{mlp_forward.1} parent=1 // pred_check
      _
    $region27: #{mlp_forward.1} parent=1 // pred_check_branch
      %50 = sbr.rel (0) target = $region29
    $region28: #{mlp_forward.1} parent=1 // pred_region
      _
    $region29: #{mlp_forward.1} parent=1 // pred_fallthru
      _
    // Predicated region
    $region30: #{mlp_forward.1} parent=1 // pred_check
      _
    $region31: #{mlp_forward.1} parent=1 // pred_check_branch
      %52 = sbr.rel (0) target = $region33
    $region32: #{mlp_forward.1} parent=1 // pred_region
      %s54 = ssub.s32 1024, 1024
      %55 = vsyncadd [#allocation6], %s54
      %s56 = sshll.u32 [#allocation7], 4
      %s57 = int_to_ptr.vmem [resolvable:$true] %s56
      %62 = dma.hbm_to_vmem [thread:$0]  %s7, 1024, %s57, [#allocation6], 64, 64, 4
    $region33: #{mlp_forward.1} parent=1 // pred_fallthru
      _
    // Predicated region
    $region34: #{mlp_forward.1} parent=1 // pred_check
      _
    $region35: #{mlp_forward.1} parent=1 // pred_check_branch
      %64 = sbr.rel (0) target = $region37
    $region36: #{mlp_forward.1} parent=1 // pred_region
      _
    $region37: #{mlp_forward.1} parent=1 // pred_fallthru
      _
    // Predicated region
    $region38: #{mlp_forward.1} parent=1 // pred_check
      _
    $region39: #{mlp_forward.1} parent=1 // pred_check_branch
      %66 = sbr.rel (0) target = $region41
    $region40: #{mlp_forward.1} parent=1 // pred_region
      %67 = dma.done [#allocation3], 1024
    $region41: #{mlp_forward.1} parent=1 // pred_fallthru
      _
    // Predicated region
    $region42: #{mlp_forward.1} parent=1 // pred_check
      _
    $region43: #{mlp_forward.1} parent=1 // pred_check_branch
      %69 = sbr.rel (0) target = $region45
    $region44: #{mlp_forward.1} parent=1 // pred_region
      %70 = dma.done [#allocation6], 1024
    $region45: #{mlp_forward.1} parent=1 // pred_fallthru
      _
    // Predicated region
    $region46: #{mlp_forward.1} parent=1 // pred_check
      _
    $region47: #{mlp_forward.1} parent=1 // pred_check_branch
      %72 = sbr.rel (0) target = $region49
    $region48: #{mlp_forward.1} parent=1 // pred_region
      %73 = dma.done [#allocation6], 1024
    $region49: #{mlp_forward.1} parent=1 // pred_fallthru
      _
    %v75 = vld [vmem:[%s0] sm:$0xff]
    %v76 = vpack.c.bf16 %v75, %v75
    %v77 = vld [vmem:[#allocation2] sm:$0xf]
    %v78 = vld [vmem:[#allocation2 + $0x4] sm:$0xf]
    %v79 = vld [vmem:[#allocation2 + $0x8] sm:$0xf]
    %v80 = vld [vmem:[#allocation2 + $0xc] sm:$0xf]
    %v81 = vld [vmem:[#allocation2 + $0x10] sm:$0xf]
    %v82 = vld [vmem:[#allocation2 + $0x14] sm:$0xf]
    %v83 = vld [vmem:[#allocation2 + $0x18] sm:$0xf]
    %v84 = vld [vmem:[#allocation2 + $0x1c] sm:$0xf]
    %v85 = vld [vmem:[#allocation2 + $0x20] sm:$0xf]
    %v86 = vld [vmem:[#allocation2 + $0x24] sm:$0xf]
    %v87 = vld [vmem:[#allocation2 + $0x28] sm:$0xf]
    %v88 = vld [vmem:[#allocation2 + $0x2c] sm:$0xf]
    %v89 = vld [vmem:[#allocation2 + $0x30] sm:$0xf]
    %v90 = vld [vmem:[#allocation2 + $0x34] sm:$0xf]
    %v91 = vld [vmem:[#allocation2 + $0x38] sm:$0xf]
    %v92 = vld [vmem:[#allocation2 + $0x3c] sm:$0xf]
    %v109 = vunpack.c.l.b16 %v77
    %v110 = vunpack.c.l.b16 %v78
    %v111 = vunpack.c.l.b16 %v79
    %v112 = vunpack.c.l.b16 %v80
    %v113 = vunpack.c.l.b16 %v81
    %v114 = vunpack.c.l.b16 %v82
    %v115 = vunpack.c.l.b16 %v83
    %v116 = vunpack.c.l.b16 %v84
    %v117 = vunpack.c.l.b16 %v85
    %v118 = vunpack.c.l.b16 %v86
    %v119 = vunpack.c.l.b16 %v87
    %v120 = vunpack.c.l.b16 %v88
    %v121 = vunpack.c.l.b16 %v89
    %v122 = vunpack.c.l.b16 %v90
    %v123 = vunpack.c.l.b16 %v91
    %v124 = vunpack.c.l.b16 %v92
    %v125 = vpack.c.b16 %v110, %v109
    %v126 = vpack.c.b16 %v112, %v111
    %v127 = vpack.c.b16 %v114, %v113
    %v128 = vpack.c.b16 %v116, %v115
    %v129 = vpack.c.b16 %v118, %v117
    %v130 = vpack.c.b16 %v120, %v119
    %v131 = vpack.c.b16 %v122, %v121
    %v132 = vpack.c.b16 %v124, %v123
    %141 = vmatprep.subr.bf16.mxu0 0
    %142 = vmatpush1.bf16.msra.mxu0 %v125
    %143 = vmatprep.subr.bf16.mxu0 0
    %144 = vmatpush1.bf16.msra.mxu0 %v126
    %145 = vmatprep.subr.bf16.mxu0 0
    %146 = vmatpush1.bf16.msra.mxu0 %v127
    %147 = vmatprep.subr.bf16.mxu0 0
    %148 = vmatpush1.bf16.msra.mxu0 %v128
    %149 = vmatprep.subr.bf16.mxu0 0
    %150 = vmatpush1.bf16.msra.mxu0 %v129
    %151 = vmatprep.subr.bf16.mxu0 0
    %152 = vmatpush1.bf16.msra.mxu0 %v130
    %153 = vmatprep.subr.bf16.mxu0 0
    %154 = vmatpush1.bf16.msra.mxu0 %v131
    %155 = vmatprep.subr.bf16.mxu0 0
    %156 = vmatpush1.bf16.msra.mxu0 %v132
    %157 = vmatprep.subr.bf16.mxu0 0
    %158 = vmatpush1.bf16.msra.mxu0 0
    %159 = vmatprep.subr.bf16.mxu0 0
    %160 = vmatpush1.bf16.msra.mxu0 0
    %161 = vmatprep.subr.bf16.mxu0 0
    %162 = vmatpush1.bf16.msra.mxu0 0
    %163 = vmatprep.subr.bf16.mxu0 0
    %164 = vmatpush1.bf16.msra.mxu0 0
    %165 = vmatprep.subr.bf16.mxu0 0
    %166 = vmatpush1.bf16.msra.mxu0 0
    %167 = vmatprep.subr.bf16.mxu0 0
    %168 = vmatpush1.bf16.msra.mxu0 0
    %169 = vmatprep.subr.bf16.mxu0 0
    %170 = vmatpush1.bf16.msra.mxu0 0
    %171 = vmatprep.subr.bf16.mxu0 0
    %172 = vmatpush1.bf16.msra.mxu0 0
    %173 = vmatprep.mubr.bf16.mxu0 0
    %174 = vmatmul.mubr.bf16.gmra.mrb[0].mxu0 %v76
    %v175 = vpop.f32.mrb[0].mxu0
    %v176 = vadd.f32 0.0, %v175
    %v177 = vpop.f32.mrb[0].mxu0
    %v178 = vpop.f32.mrb[0].mxu0
    %v179 = vpop.f32.mrb[0].mxu0
    %180 = vdwg.mxu0
    %v181 = vrot.slane %v176, 4
    %v182 = vadd.f32 %v176, %v181
    %v183 = vrot.slane %v182, 2
    %v184 = vadd.f32 %v182, %v183
    %v185 = vrot.slane %v184, 1
    %v186 = vadd.f32 %v184, %v185
    %v187 = vrcp.pop 8.0
    %v188 = vmul.f32 %v186, %v187
    %v189 = vmul.f32 %v176, %v176
    %v190 = vrot.slane %v189, 4
    %v191 = vadd.f32 %v189, %v190
    %v192 = vrot.slane %v191, 2
    %v193 = vadd.f32 %v191, %v192
    %v194 = vrot.slane %v193, 1
    %v195 = vadd.f32 %v193, %v194
    %v196 = vmul.f32 %v195, %v187
    %v197 = vmul.f32 %v188, %v188
    %v198 = vsub.f32 %v196, %v197
    %v199 = vmax.f32 %v198, 0.0
    %v200 = vld [vmem:[%s2] sm:$0x1]
    %v201 = vadd.f32 %v199, 1e-05
    %v202 = vrsqrt.pop %v201
    %v203 = vmul.f32 %v200, %v202
    %v204 = vld [vmem:[%s3] sm:$0x1]
    %v205 = vmul.f32 %v188, %v203
    %v206 = vsub.f32 %v204, %v205
    %v208 = vlaneseq
    %v209 = vshrl.u32 %v208, 7
    %v210 = vsub.s32 0, %v209
    %v211 = vrot.slane %v203, %v210
    %v213 = vmul.f32 %v176, %v211
    %v215 = vlaneseq
    %v216 = vshrl.u32 %v215, 7
    %v217 = vsub.s32 0, %v216
    %v218 = vrot.slane %v206, %v217
    %v220 = vadd.f32 %v213, %v218
    %v221 = vmax.f32 %v220, 0.0
    %v222 = vpack.c.bf16 %v221, %v221
    %v223 = vld [vmem:[#allocation5] sm:$0xf]
    %v224 = vld [vmem:[#allocation5 + $0x4] sm:$0xf]
    %v225 = vld [vmem:[#allocation5 + $0x8] sm:$0xf]
    %v226 = vld [vmem:[#allocation5 + $0xc] sm:$0xf]
    %v227 = vld [vmem:[#allocation5 + $0x10] sm:$0xf]
    %v228 = vld [vmem:[#allocation5 + $0x14] sm:$0xf]
    %v229 = vld [vmem:[#allocation5 + $0x18] sm:$0xf]
    %v230 = vld [vmem:[#allocation5 + $0x1c] sm:$0xf]
    %v231 = vld [vmem:[#allocation5 + $0x20] sm:$0xf]
    %v232 = vld [vmem:[#allocation5 + $0x24] sm:$0xf]
    %v233 = vld [vmem:[#allocation5 + $0x28] sm:$0xf]
    %v234 = vld [vmem:[#allocation5 + $0x2c] sm:$0xf]
    %v235 = vld [vmem:[#allocation5 + $0x30] sm:$0xf]
    %v236 = vld [vmem:[#allocation5 + $0x34] sm:$0xf]
    %v237 = vld [vmem:[#allocation5 + $0x38] sm:$0xf]
    %v238 = vld [vmem:[#allocation5 + $0x3c] sm:$0xf]
    %v255 = vunpack.c.l.b16 %v223
    %v256 = vunpack.c.l.b16 %v224
    %v257 = vunpack.c.l.b16 %v225
    %v258 = vunpack.c.l.b16 %v226
    %v259 = vunpack.c.l.b16 %v227
    %v260 = vunpack.c.l.b16 %v228
    %v261 = vunpack.c.l.b16 %v229
    %v262 = vunpack.c.l.b16 %v230
    %v263 = vunpack.c.l.b16 %v231
    %v264 = vunpack.c.l.b16 %v232
    %v265 = vunpack.c.l.b16 %v233
    %v266 = vunpack.c.l.b16 %v234
    %v267 = vunpack.c.l.b16 %v235
    %v268 = vunpack.c.l.b16 %v236
    %v269 = vunpack.c.l.b16 %v237
    %v270 = vunpack.c.l.b16 %v238
    %v271 = vpack.c.b16 %v256, %v255
    %v272 = vpack.c.b16 %v258, %v257
    %v273 = vpack.c.b16 %v260, %v259
    %v274 = vpack.c.b16 %v262, %v261
    %v275 = vpack.c.b16 %v264, %v263
    %v276 = vpack.c.b16 %v266, %v265
    %v277 = vpack.c.b16 %v268, %v267
    %v278 = vpack.c.b16 %v270, %v269
    %287 = vmatprep.subr.bf16.mxu0 0
    %288 = vmatpush1.bf16.msra.mxu0 %v271
    %289 = vmatprep.subr.bf16.mxu0 0
    %290 = vmatpush1.bf16.msra.mxu0 %v272
    %291 = vmatprep.subr.bf16.mxu0 0
    %292 = vmatpush1.bf16.msra.mxu0 %v273
    %293 = vmatprep.subr.bf16.mxu0 0
    %294 = vmatpush1.bf16.msra.mxu0 %v274
    %295 = vmatprep.subr.bf16.mxu0 0
    %296 = vmatpush1.bf16.msra.mxu0 %v275
    %297 = vmatprep.subr.bf16.mxu0 0
    %298 = vmatpush1.bf16.msra.mxu0 %v276
    %299 = vmatprep.subr.bf16.mxu0 0
    %300 = vmatpush1.bf16.msra.mxu0 %v277
    %301 = vmatprep.subr.bf16.mxu0 0
    %302 = vmatpush1.bf16.msra.mxu0 %v278
    %303 = vmatprep.subr.bf16.mxu0 0
    %304 = vmatpush1.bf16.msra.mxu0 0
    %305 = vmatprep.subr.bf16.mxu0 0
    %306 = vmatpush1.bf16.msra.mxu0 0
    %307 = vmatprep.subr.bf16.mxu0 0
    %308 = vmatpush1.bf16.msra.mxu0 0
    %309 = vmatprep.subr.bf16.mxu0 0
    %310 = vmatpush1.bf16.msra.mxu0 0
    %311 = vmatprep.subr.bf16.mxu0 0
    %312 = vmatpush1.bf16.msra.mxu0 0
    %313 = vmatprep.subr.bf16.mxu0 0
    %314 = vmatpush1.bf16.msra.mxu0 0
    %315 = vmatprep.subr.bf16.mxu0 0
    %316 = vmatpush1.bf16.msra.mxu0 0
    %317 = vmatprep.subr.bf16.mxu0 0
    %318 = vmatpush1.bf16.msra.mxu0 0
    %319 = vmatprep.mubr.bf16.mxu0 0
    %320 = vmatmul.mubr.bf16.gmra.mrb[0].mxu0 %v222
    %v321 = vpop.f32.mrb[0].mxu0
    %v322 = vadd.f32 0.0, %v321
    %v323 = vpop.f32.mrb[0].mxu0
    %v324 = vpop.f32.mrb[0].mxu0
    %v325 = vpop.f32.mrb[0].mxu0
    %326 = vdwg.mxu0
    %v327 = vrot.slane %v322, 4
    %v328 = vadd.f32 %v322, %v327
    %v329 = vrot.slane %v328, 2
    %v330 = vadd.f32 %v328, %v329
    %v331 = vrot.slane %v330, 1
    %v332 = vadd.f32 %v330, %v331
    %v333 = vmul.f32 %v332, %v187
    %v334 = vmul.f32 %v322, %v322
    %v335 = vrot.slane %v334, 4
    %v336 = vadd.f32 %v334, %v335
    %v337 = vrot.slane %v336, 2
    %v338 = vadd.f32 %v336, %v337
    %v339 = vrot.slane %v338, 1
    %v340 = vadd.f32 %v338, %v339
    %v341 = vmul.f32 %v340, %v187
    %v342 = vmul.f32 %v333, %v333
    %v343 = vsub.f32 %v341, %v342
    %v344 = vmax.f32 %v343, 0.0
    %v345 = vld [vmem:[%s5] sm:$0x1]
    %v346 = vadd.f32 %v344, 1e-05
    %v347 = vrsqrt.pop %v346
    %v348 = vmul.f32 %v345, %v347
    %v349 = vld [vmem:[%s6] sm:$0x1]
    %v350 = vmul.f32 %v333, %v348
    %v351 = vsub.f32 %v349, %v350
    %v353 = vlaneseq
    %v354 = vshrl.u32 %v353, 7
    %v355 = vsub.s32 0, %v354
    %v356 = vrot.slane %v348, %v355
    %v358 = vmul.f32 %v322, %v356
    %v360 = vlaneseq
    %v361 = vshrl.u32 %v360, 7
    %v362 = vsub.s32 0, %v361
    %v363 = vrot.slane %v351, %v362
    %v365 = vadd.f32 %v358, %v363
    %v366 = vmax.f32 %v365, 0.0
    %v367 = vpack.c.bf16 %v366, %v366
    %v368 = vld [vmem:[#allocation7] sm:$0xf]
    %v369 = vld [vmem:[#allocation7 + $0x4] sm:$0xf]
    %v370 = vld [vmem:[#allocation7 + $0x8] sm:$0xf]
    %v371 = vld [vmem:[#allocation7 + $0xc] sm:$0xf]
    %v372 = vld [vmem:[#allocation7 + $0x10] sm:$0xf]
    %v373 = vld [vmem:[#allocation7 + $0x14] sm:$0xf]
    %v374 = vld [vmem:[#allocation7 + $0x18] sm:$0xf]
    %v375 = vld [vmem:[#allocation7 + $0x1c] sm:$0xf]
    %v376 = vld [vmem:[#allocation7 + $0x20] sm:$0xf]
    %v377 = vld [vmem:[#allocation7 + $0x24] sm:$0xf]
    %v378 = vld [vmem:[#allocation7 + $0x28] sm:$0xf]
    %v379 = vld [vmem:[#allocation7 + $0x2c] sm:$0xf]
    %v380 = vld [vmem:[#allocation7 + $0x30] sm:$0xf]
    %v381 = vld [vmem:[#allocation7 + $0x34] sm:$0xf]
    %v382 = vld [vmem:[#allocation7 + $0x38] sm:$0xf]
    %v383 = vld [vmem:[#allocation7 + $0x3c] sm:$0xf]
    %v384 = vld [vmem:[%s8] sm:$0x1]
    %v386 = vlaneseq
    %v387 = vshrl.u32 %v386, 7
    %v388 = vsub.s32 0, %v387
    %v389 = vrot.slane %v384, %v388
    %v407 = vunpack.c.l.b16 %v368
    %v408 = vunpack.c.l.b16 %v369
    %v409 = vunpack.c.l.b16 %v370
    %v410 = vunpack.c.l.b16 %v371
    %v411 = vunpack.c.l.b16 %v372
    %v412 = vunpack.c.l.b16 %v373
    %v413 = vunpack.c.l.b16 %v374
    %v414 = vunpack.c.l.b16 %v375
    %v415 = vunpack.c.l.b16 %v376
    %v416 = vunpack.c.l.b16 %v377
    %v417 = vunpack.c.l.b16 %v378
    %v418 = vunpack.c.l.b16 %v379
    %v419 = vunpack.c.l.b16 %v380
    %v420 = vunpack.c.l.b16 %v381
    %v421 = vunpack.c.l.b16 %v382
    %v422 = vunpack.c.l.b16 %v383
    %v423 = vpack.c.b16 %v408, %v407
    %v424 = vpack.c.b16 %v410, %v409
    %v425 = vpack.c.b16 %v412, %v411
    %v426 = vpack.c.b16 %v414, %v413
    %v427 = vpack.c.b16 %v416, %v415
    %v428 = vpack.c.b16 %v418, %v417
    %v429 = vpack.c.b16 %v420, %v419
    %v430 = vpack.c.b16 %v422, %v421
    %439 = vmatprep.subr.bf16.mxu0 0
    %440 = vmatpush1.bf16.msra.mxu0 %v423
    %441 = vmatprep.subr.bf16.mxu0 0
    %442 = vmatpush1.bf16.msra.mxu0 %v424
    %443 = vmatprep.subr.bf16.mxu0 0
    %444 = vmatpush1.bf16.msra.mxu0 %v425
    %445 = vmatprep.subr.bf16.mxu0 0
    %446 = vmatpush1.bf16.msra.mxu0 %v426
    %447 = vmatprep.subr.bf16.mxu0 0
    %448 = vmatpush1.bf16.msra.mxu0 %v427
    %449 = vmatprep.subr.bf16.mxu0 0
    %450 = vmatpush1.bf16.msra.mxu0 %v428
    %451 = vmatprep.subr.bf16.mxu0 0
    %452 = vmatpush1.bf16.msra.mxu0 %v429
    %453 = vmatprep.subr.bf16.mxu0 0
    %454 = vmatpush1.bf16.msra.mxu0 %v430
    %455 = vmatprep.subr.bf16.mxu0 0
    %456 = vmatpush1.bf16.msra.mxu0 0
    %457 = vmatprep.subr.bf16.mxu0 0
    %458 = vmatpush1.bf16.msra.mxu0 0
    %459 = vmatprep.subr.bf16.mxu0 0
    %460 = vmatpush1.bf16.msra.mxu0 0
    %461 = vmatprep.subr.bf16.mxu0 0
    %462 = vmatpush1.bf16.msra.mxu0 0
    %463 = vmatprep.subr.bf16.mxu0 0
    %464 = vmatpush1.bf16.msra.mxu0 0
    %465 = vmatprep.subr.bf16.mxu0 0
    %466 = vmatpush1.bf16.msra.mxu0 0
    %467 = vmatprep.subr.bf16.mxu0 0
    %468 = vmatpush1.bf16.msra.mxu0 0
    %469 = vmatprep.subr.bf16.mxu0 0
    %470 = vmatpush1.bf16.msra.mxu0 0
    %471 = vmatprep.mubr.bf16.mxu0 0
    %472 = vmatmul.mubr.bf16.gmra.mrb[0].mxu0 %v367
    %v473 = vpop.f32.mrb[0].mxu0
    %v474 = vadd.f32 %v389, %v473
    %v475 = vpop.f32.mrb[0].mxu0
    %v476 = vpop.f32.mrb[0].mxu0
    %v477 = vpop.f32.mrb[0].mxu0
    %478 = vdwg.mxu0
    %v479 = vlaneseq
    %v480 = vand.u32 %v479, 127
    %vm481 = vcmp.lt.s32.totalorder %v480, 16
    %v482 = vsel %vm481, %v474, -1e+30
    %483 = vmax.xlane.f32.xlu0 %v482
    %v484 = vpop.xlane.xlu0 %483
    %v485 = vsub.f32 %v482, %v484
    %v486 = vmul.f32 %v485, 1.442695
    %v487 = vpow.pop %v486
    %488 = vadd.xlane.f32.xlu0 %v487
    %v489 = vpop.xlane.xlu0 %488
    %v490 = vrcp.pop %v489
    %v491 = vmul.f32 %v487, %v490
    %492 = vst [vmem:[#allocation8] sm:$0xff] %v491
    // Predicated region
    $region50: #{mlp_forward.1} parent=1 // pred_check
      _
    $region51: #{mlp_forward.1} parent=1 // pred_check_branch
      %494 = sbr.rel (0) target = $region53
    $region52: #{mlp_forward.1} parent=1 // pred_region
      %s496 = ssub.s32 128, 128
      %497 = vsyncadd [#allocation4], %s496
      %s499 = sshll.u32 [#allocation8], 4
      %s500 = int_to_ptr.vmem [resolvable:$true] %s499
      %502 = dma.vmem_to_hbm [thread:$0]  %s500, 128, %s9, [#allocation4]
    $region53: #{mlp_forward.1} parent=1 // pred_fallthru
      _
    // Predicated region
    $region54: #{mlp_forward.1} parent=1 // pred_check
      _
    $region55: #{mlp_forward.1} parent=1 // pred_check_branch
      %504 = sbr.rel (0) target = $region57
    $region56: #{mlp_forward.1} parent=1 // pred_region
      %505 = dma.done [#allocation4], 128
    $region57: #{mlp_forward.1} parent=1 // pred_fallthru
      _
    %506 = vsyncpa [#allocation3], 1
    %507 = vsyncpa [#allocation6], 1
    %508 = vsyncpa [#allocation4], 1

</llo_original>
